<compile_context>
chip_gen: v7x
topology: tpu7x:2x2x1
jax: 0.10.0
libtpu: 0.0.40
codegen_flags: <defaults>
</compile_context>

<pallas_src>
import functools

import jax
import jax.numpy as jnp
from jax.experimental import pallas as pl
from jax.experimental.pallas import tpu as pltpu


def _round_up(x, m):
    return ((x + m - 1) // m) * m


def _vmem_cap_bytes():
    # Generation-aware VMEM capacity (128 MiB v5e/v6e, 64 MiB per-TC v7x).
    try:
        return int(pltpu.get_tpu_info().vmem_capacity_bytes)
    except Exception:  # conservative fallback
        return 64 << 20


def prepare_time_params(weight, bias):
    """One-time parameter prep (call once, NOT per forward).

    weight: (out_features, in_features) PyTorch nn.Linear layout.
    bias:   (out_features,)

    Returns (w_prepped, b_prepped) with w_prepped in (in, out) layout, both
    zero-padded to 128-lane multiples.  Zero padding is semantics-preserving:
    relu(0) = 0 and padded weight/bias entries are zero, so padded output
    rows/cols are exactly zero and are sliced away.
    """
    out_f, in_f = weight.shape
    in_p = _round_up(in_f, 128)
    out_p = _round_up(out_f, 128)
    w = jnp.asarray(weight).T                                  # (in, out)
    w = jnp.pad(w, ((0, in_p - in_f), (0, out_p - out_f)))
    b = jnp.pad(jnp.asarray(bias).reshape(1, out_f), ((0, 0), (0, out_p - out_f)))
    return w, b


def time_kernel(x_ref, w_ref, b_ref, o_ref):
    # ReLU on the VPU in the activation's native dtype, cast to the weight
    # dtype so the MXU can run narrow; canonical [M,K]@[K,N] matmul with f32
    # accumulation; bias add fused on the VPU.
    x = jnp.maximum(x_ref[...], 0).astype(w_ref.dtype)
    y = jnp.dot(x, w_ref[...], preferred_element_type=jnp.float32)
    o_ref[...] = (y + b_ref[...].astype(jnp.float32)).astype(o_ref.dtype)


@functools.partial(jax.jit, static_argnames=("out_features", "block_b"))
def time_forward(t_emb, w_prepped, b_prepped, *, out_features, block_b=512):
    """t_emb: (B, D_in); w_prepped/b_prepped from prepare_time_params."""
    B, D_in = t_emb.shape
    Dp_in, Dp_out = w_prepped.shape
    if Dp_in != _round_up(D_in, 128):
        raise ValueError("w_prepped in-dim does not match padded t_emb features")

    out_dtype = t_emb.dtype
    x_item = jnp.dtype(out_dtype).itemsize
    w_item = jnp.dtype(w_prepped.dtype).itemsize
    b_item = jnp.dtype(b_prepped.dtype).itemsize

    # Dtype-aware sublane multiple: 8 (f32), 16 (bf16/f16), 32 (int8/fp8).
    sub = max(8, 32 // x_item)

    # Batch tiling: large tiles (memory-bound), but keep >= 2 grid steps when
    # the batch allows so the "parallel" axis shards across both v7x TCs.
    Bp = _round_up(B, sub)
    if Bp >= 2 * sub and Bp < 2 * block_b:
        TB = min(block_b, _round_up(pl.cdiv(Bp, 2), sub))
    else:
        TB = min(block_b, Bp)
    TB = _round_up(TB, sub)
    Bp = _round_up(Bp, TB)

    # Out-dim tiling: keep the weight fully VMEM-resident when it fits the
    # per-operand (double-buffered) budget, otherwise tile the out dimension.
    vmem_cap = _vmem_cap_bytes()
    w_budget = max(vmem_cap // 4, 8 << 20)
    TN = Dp_out
    while TN % 256 == 0 and 2 * Dp_in * TN * w_item > w_budget:
        TN //= 2

    # Pad only the activation per call (params were padded once, offline).
    x = t_emb
    if (Bp, Dp_in) != (B, D_in):
        x = jnp.pad(x, ((0, Bp - B), (0, Dp_in - D_in)))

    grid = (Bp // TB, Dp_out // TN)

    # VMEM request: double-buffered working set with 2x headroom; no 32 MiB
    # floor for tiny shapes, capped at ~85% of physical capacity.
    working = 2 * (TB * Dp_in * x_item + TB * TN * x_item
                   + Dp_in * TN * w_item + TN * b_item)
    vmem_bytes = int(min(max(2 * working + (1 << 20), 8 << 20),
                         int(0.85 * vmem_cap)))

    cost = pl.CostEstimate(
        flops=2 * Bp * Dp_in * Dp_out,
        transcendentals=0,
        bytes_accessed=x_item * (Bp * Dp_in + Bp * Dp_out)
        + w_item * Dp_in * Dp_out
        + b_item * Dp_out,
    )

    out = pl.pallas_call(
        time_kernel,
        out_shape=jax.ShapeDtypeStruct((Bp, Dp_out), out_dtype),
        grid_spec=pltpu.PrefetchScalarGridSpec(
            num_scalar_prefetch=0,
            grid=grid,
            in_specs=[
                pl.BlockSpec((TB, Dp_in), lambda i, j: (i, 0)),   # activations
                pl.BlockSpec((Dp_in, TN), lambda i, j: (0, j)),   # weight (in,out)
                pl.BlockSpec((1, TN), lambda i, j: (0, j)),       # bias
            ],
            out_specs=pl.BlockSpec((TB, TN), lambda i, j: (i, j)),
        ),
        compiler_params=pltpu.CompilerParams(
            dimension_semantics=("parallel", "parallel"),
            vmem_limit_bytes=vmem_bytes,
        ),
        cost_estimate=cost,
    )(x, w_prepped, b_prepped)

    if Bp != B or Dp_out != out_features:
        out = out[:B, :out_features]
    return out


if __name__ == "__main__":
    # Small shapes consistent with the module: time_emb_dim=32, batch=8.
    B, D = 8, 32
    key = jax.random.PRNGKey(0)
    k_x, k_w, k_b = jax.random.split(key, 3)

    # Deterministic init mimicking nn.Linear uniform(-1/sqrt(D), 1/sqrt(D)).
    bound = 1.0 / (D ** 0.5)
    weight = jax.random.uniform(k_w, (D, D), jnp.float32, -bound, bound)  # (out, in)
    bias = jax.random.uniform(k_b, (D,), jnp.float32, -bound, bound)
    t_emb = jax.random.normal(k_x, (B, D), jnp.float32)

    # One-time parameter prep (transpose + pad), outside the per-call path.
    w_p, b_p = prepare_time_params(weight, bias)

    out = time_forward(t_emb, w_p, b_p, out_features=D)
    out = jax.block_until_ready(out)

    # Pure-JAX reference: Linear(relu(x)) with PyTorch semantics.
    ref = jnp.maximum(t_emb, 0.0) @ weight.T + bias
    assert out.shape == (B, D)
    assert jnp.allclose(out, ref, atol=1e-5, rtol=1e-5)

    print("KERNEL_OK")
</pallas_src>

<mosaic_0001>
module attributes {stable_mosaic.version = 11 : i64} {
  func.func @time_kernel(%arg0: i32, %arg1: i32, %arg2: memref<8x128xf32, #tpu.memory_space<vmem>>, %arg3: memref<128x128xf32, #tpu.memory_space<vmem>>, %arg4: memref<1x128xf32, #tpu.memory_space<vmem>>, %arg5: memref<8x128xf32, #tpu.memory_space<vmem>>) attributes {dimension_semantics = [#tpu.dimension_semantics<parallel>, #tpu.dimension_semantics<parallel>], iteration_bounds = array<i64: 1, 1>, scalar_prefetch = 0 : i64, scratch_operands = 0 : i64, tpu.core_type = #tpu.core_type<tc>, window_params = [{transform_indices = @transform_0, window_bounds = array<i64: 8, 128>}, {transform_indices = @transform_1, window_bounds = array<i64: 128, 128>}, {transform_indices = @transform_2, window_bounds = array<i64: 1, 128>}, {transform_indices = @transform_3, window_bounds = array<i64: 8, 128>}]} {
    %c0 = arith.constant 0 : index
    %c0_0 = arith.constant 0 : index
    %0 = vector.load %arg2[%c0, %c0_0] : memref<8x128xf32, #tpu.memory_space<vmem>>, vector<8x128xf32>
    %cst = arith.constant 0.000000e+00 : f32
    %1 = vector.broadcast %cst : f32 to vector<8x128xf32>
    %2 = arith.maximumf %0, %1 : vector<8x128xf32>
    %c0_1 = arith.constant 0 : index
    %c0_2 = arith.constant 0 : index
    %3 = vector.load %arg3[%c0_1, %c0_2] : memref<128x128xf32, #tpu.memory_space<vmem>>, vector<128x128xf32>
    %cst_3 = arith.constant dense<0.000000e+00> : vector<8x128xf32>
    %4 = tpu.matmul %2, %3, %cst_3 {dimension_numbers = #tpu.dot_dimension_numbers<[1], [0], [0], [1], [0, 0, 1, 1], [], []>} : vector<8x128xf32>, vector<128x128xf32>, vector<8x128xf32> -> vector<8x128xf32>
    %c0_4 = arith.constant 0 : index
    %c0_5 = arith.constant 0 : index
    %5 = vector.load %arg4[%c0_4, %c0_5] : memref<1x128xf32, #tpu.memory_space<vmem>>, vector<1x128xf32>
    %6 = vector.broadcast %5 : vector<1x128xf32> to vector<8x128xf32>
    %7 = arith.addf %4, %6 : vector<8x128xf32>
    %c0_6 = arith.constant 0 : index
    %c0_7 = arith.constant 0 : index
    %8 = vector.load %arg5[%c0_6, %c0_7] : memref<8x128xf32, #tpu.memory_space<vmem>>, vector<8x128xf32>
    tpu.vector_store %arg5[%c0_6, %c0_7], %7 {strides = array<i32>} : memref<8x128xf32, #tpu.memory_space<vmem>>, vector<8x128xf32>,
    return
  }
  func.func @transform_0(%arg0: i32, %arg1: i32) -> (i32, i32) {
    %c0_i32 = arith.constant 0 : i32
    %c0_i32_0 = arith.constant 0 : i32
    return %arg0, %c0_i32 : i32, i32
  }
  func.func @transform_1(%arg0: i32, %arg1: i32) -> (i32, i32) {
    %c0_i32 = arith.constant 0 : i32
    %c0_i32_0 = arith.constant 0 : i32
    return %c0_i32, %arg1 : i32, i32
  }
  func.func @transform_2(%arg0: i32, %arg1: i32) -> (i32, i32) {
    %c0_i32 = arith.constant 0 : i32
    %c0_i32_0 = arith.constant 0 : i32
    return %c0_i32, %arg1 : i32, i32
  }
  func.func @transform_3(%arg0: i32, %arg1: i32) -> (i32, i32) {
    %c0_i32 = arith.constant 0 : i32
    return %arg0, %arg1 : i32, i32
  }
}

</mosaic_0001>

<llo_original>
// kernel: time_forward.1
$region0: #{time_forward.1}
  #allocation0 [shape = 'u32[]', space=smem, size = 0x4, offset = 0x4, fixed_abs, tag = 'smem constant byte address 0x4 - core index']
  #allocation1 [shape = 'u32[144,128]{1,0:T(1,128)}', space=vmem, size = 0x12000, scoped, tag = 'internal scratch']
  %s0 = inlined_call_operand.vmem [shape: f32[8,128], index: 0, kind: input, shape index: {}]
  %s1 = inlined_call_operand.hbm [shape: f32[128,128], index: 1, kind: input, shape index: {}]
  %s2 = inlined_call_operand.vmem [shape: f32[1,128], index: 2, kind: input, shape index: {}]
  %s3 = inlined_call_operand.hbm [shape: f32[8,128], index: 3, kind: output, shape index: {}]
  %s4 = sld [smem:[#allocation0]]
  $region26: #{time_forward.1} parent=0
    _
  %s6 = ssub.s32 1, %s4
  %s7 = scalar_select 0, %s6, %s4
  $region1: #{time_forward.1} parent=0
    #allocation2 [shape = 'u8[65536]{0}', space=vmem, size = 0x10000, scoped, tag = 'input window, operand 1, single buffered']
    #allocation3 [shape = 's32[1]{0}', space=sflag, size = 0x4, scoped, tag = 'scoped memory for time_forward.1']
    #allocation4 [shape = 's32[1]{0}', space=sflag, size = 0x4, scoped, tag = 'scoped memory for time_forward.1']
    #allocation5 [shape = 'u8[4096]{0}', space=vmem, size = 0x1000, scoped, tag = 'output window, operand 0, single buffered']
    %8 = vsyncpa [#allocation3], 0
    %9 = vsyncpa [#allocation4], 0
    // Predicated region
    $region2: #{time_forward.1} parent=1 // pred_check
      _
    $region3: #{time_forward.1} parent=1 // pred_check_branch
      %11 = sbr.rel (0) target = $region5
    $region4: #{time_forward.1} parent=1 // pred_region
      _
    $region5: #{time_forward.1} parent=1 // pred_fallthru
      _
    // Predicated region
    $region6: #{time_forward.1} parent=1 // pred_check
      _
    $region7: #{time_forward.1} parent=1 // pred_check_branch
      %13 = sbr.rel (0) target = $region9
    $region8: #{time_forward.1} parent=1 // pred_region
      %s15 = ssub.s32 2048, 2048
      %16 = vsyncadd [#allocation3], %s15
      %s17 = sshll.u32 [#allocation2], 4
      %s18 = int_to_ptr.vmem [resolvable:$true] %s17
      %23 = dma.hbm_to_vmem [thread:$0]  %s1, 2048, %s18, [#allocation3], 128, 128, 8
    $region9: #{time_forward.1} parent=1 // pred_fallthru
      _
    // Predicated region
    $region10: #{time_forward.1} parent=1 // pred_check
      _
    $region11: #{time_forward.1} parent=1 // pred_check_branch
      %25 = sbr.rel (0) target = $region13
    $region12: #{time_forward.1} parent=1 // pred_region
      _
    $region13: #{time_forward.1} parent=1 // pred_fallthru
      _
    // Predicated region
    $region14: #{time_forward.1} parent=1 // pred_check
      _
    $region15: #{time_forward.1} parent=1 // pred_check_branch
      %27 = sbr.rel (0) target = $region17
    $region16: #{time_forward.1} parent=1 // pred_region
      %28 = dma.done [#allocation3], 2048
    $region17: #{time_forward.1} parent=1 // pred_fallthru
      _
    %v29 = vld [vmem:[%s0] sm:$0xff]
    %v30 = vmax.f32 %v29, 0.0
    %v31 = vld [vmem:[#allocation2] sm:$0xff]
    %v32 = vld [vmem:[#allocation2 + $0x8] sm:$0xff]
    %v33 = vld [vmem:[#allocation2 + $0x10] sm:$0xff]
    %v34 = vld [vmem:[#allocation2 + $0x18] sm:$0xff]
    %v35 = vld [vmem:[#allocation2 + $0x20] sm:$0xff]
    %v36 = vld [vmem:[#allocation2 + $0x28] sm:$0xff]
    %v37 = vld [vmem:[#allocation2 + $0x30] sm:$0xff]
    %v38 = vld [vmem:[#allocation2 + $0x38] sm:$0xff]
    %v39 = vld [vmem:[#allocation2 + $0x40] sm:$0xff]
    %v40 = vld [vmem:[#allocation2 + $0x48] sm:$0xff]
    %v41 = vld [vmem:[#allocation2 + $0x50] sm:$0xff]
    %v42 = vld [vmem:[#allocation2 + $0x58] sm:$0xff]
    %v43 = vld [vmem:[#allocation2 + $0x60] sm:$0xff]
    %v44 = vld [vmem:[#allocation2 + $0x68] sm:$0xff]
    %v45 = vld [vmem:[#allocation2 + $0x70] sm:$0xff]
    %v46 = vld [vmem:[#allocation2 + $0x78] sm:$0xff]
    %v47 = vld [vmem:[%s2] sm:$0x1]
    %v49 = vlaneseq
    %v50 = vshrl.u32 %v49, 7
    %v51 = vsub.s32 0, %v50
    %v52 = vrot.slane %v47, %v51
    %54 = vmatprep.subr.mxu0 0.0
    %55 = vmatpush1.msra.mxu0 %v31
    %56 = vmatprep.subr.mxu0 0.0
    %57 = vmatpush1.msra.mxu0 %v32
    %58 = vmatprep.subr.mxu0 0.0
    %59 = vmatpush1.msra.mxu0 %v33
    %60 = vmatprep.subr.mxu0 0.0
    %61 = vmatpush1.msra.mxu0 %v34
    %62 = vmatprep.subr.mxu0 0.0
    %63 = vmatpush1.msra.mxu0 %v35
    %64 = vmatprep.subr.mxu0 0.0
    %65 = vmatpush1.msra.mxu0 %v36
    %66 = vmatprep.subr.mxu0 0.0
    %67 = vmatpush1.msra.mxu0 %v37
    %68 = vmatprep.subr.mxu0 0.0
    %69 = vmatpush1.msra.mxu0 %v38
    %70 = vmatprep.subr.mxu0 0.0
    %71 = vmatpush1.msra.mxu0 %v39
    %72 = vmatprep.subr.mxu0 0.0
    %73 = vmatpush1.msra.mxu0 %v40
    %74 = vmatprep.subr.mxu0 0.0
    %75 = vmatpush1.msra.mxu0 %v41
    %76 = vmatprep.subr.mxu0 0.0
    %77 = vmatpush1.msra.mxu0 %v42
    %78 = vmatprep.subr.mxu0 0.0
    %79 = vmatpush1.msra.mxu0 %v43
    %80 = vmatprep.subr.mxu0 0.0
    %81 = vmatpush1.msra.mxu0 %v44
    %82 = vmatprep.subr.mxu0 0.0
    %83 = vmatpush1.msra.mxu0 %v45
    %84 = vmatprep.subr.mxu0 0.0
    %85 = vmatpush1.msra.mxu0 %v46
    %86 = vmatprep.subr.mxu0 0.0
    %87 = vmatpush1.msra.mxu0 0.0
    %88 = vmatprep.subr.mxu0 0.0
    %89 = vmatpush1.msra.mxu0 0.0
    %90 = vmatprep.subr.mxu0 0.0
    %91 = vmatpush1.msra.mxu0 0.0
    %92 = vmatprep.subr.mxu0 0.0
    %93 = vmatpush1.msra.mxu0 0.0
    %94 = vmatprep.subr.mxu0 0.0
    %95 = vmatpush1.msra.mxu0 0.0
    %96 = vmatprep.subr.mxu0 0.0
    %97 = vmatpush1.msra.mxu0 0.0
    %98 = vmatprep.subr.mxu0 0.0
    %99 = vmatpush1.msra.mxu0 0.0
    %100 = vmatprep.subr.mxu0 0.0
    %101 = vmatpush1.msra.mxu0 0.0
    %102 = vmatprep.subr.mxu0 0.0
    %103 = vmatpush1.msra.mxu0 0.0
    %104 = vmatprep.subr.mxu0 0.0
    %105 = vmatpush1.msra.mxu0 0.0
    %106 = vmatprep.subr.mxu0 0.0
    %107 = vmatpush1.msra.mxu0 0.0
    %108 = vmatprep.subr.mxu0 0.0
    %109 = vmatpush1.msra.mxu0 0.0
    %110 = vmatprep.subr.mxu0 0.0
    %111 = vmatpush1.msra.mxu0 0.0
    %112 = vmatprep.subr.mxu0 0.0
    %113 = vmatpush1.msra.mxu0 0.0
    %114 = vmatprep.subr.mxu0 0.0
    %115 = vmatpush1.msra.mxu0 0.0
    %116 = vmatprep.subr.mxu0 0.0
    %117 = vmatpush1.msra.mxu0 0.0
    %118 = vmatprep.mubr.f32.mxu0 0.0
    %119 = vmatmul.mubr.f32.gmra.mrb[0].mxu0 %v30
    %v120 = vpop.f32.mrb[0].mxu0
    %v121 = vadd.f32 %v52, %v120
    %v122 = vpop.f32.mrb[0].mxu0
    %123 = vdwg.mxu0
    %124 = vst [vmem:[#allocation5] sm:$0xff] %v121
    // Predicated region
    $region18: #{time_forward.1} parent=1 // pred_check
      _
    $region19: #{time_forward.1} parent=1 // pred_check_branch
      %126 = sbr.rel (0) target = $region21
    $region20: #{time_forward.1} parent=1 // pred_region
      %s128 = ssub.s32 128, 128
      %129 = vsyncadd [#allocation4], %s128
      %s131 = sshll.u32 [#allocation5], 4
      %s132 = int_to_ptr.vmem [resolvable:$true] %s131
      %134 = dma.vmem_to_hbm [thread:$0]  %s132, 128, %s3, [#allocation4]
    $region21: #{time_forward.1} parent=1 // pred_fallthru
      _
    // Predicated region
    $region22: #{time_forward.1} parent=1 // pred_check
      _
    $region23: #{time_forward.1} parent=1 // pred_check_branch
      %136 = sbr.rel (0) target = $region25
    $region24: #{time_forward.1} parent=1 // pred_region
      %137 = dma.done [#allocation4], 128
    $region25: #{time_forward.1} parent=1 // pred_fallthru
      _
    %138 = vsyncpa [#allocation3], 1
    %139 = vsyncpa [#allocation4], 1

</llo_original>
